<compile_context>
chip_gen: v5e
topology: v5e:2x2
jax: 0.10.0
libtpu: 0.0.40
codegen_flags: <defaults>
</compile_context>

<pallas_src>
import numpy as np
import jax
import jax.numpy as jnp
from jax import lax
from jax.experimental import pallas as pl
from jax.experimental.pallas import tpu as pltpu

_EPS = 1e-12


# ----------------------------------------------------------------------------
# Host-side deterministic setup (buffers: angles, faces, border groups, masks)
# ----------------------------------------------------------------------------
def _cube_points(n):
    u = np.linspace(-1.0, 1.0, n)
    uu, vv = np.meshgrid(u, u, indexing="ij")
    one = np.ones_like(uu)
    faces_xyz = [
        np.stack([one, uu, vv], axis=-1),    # face 0: x = +1
        np.stack([-one, uu, vv], axis=-1),   # face 1: x = -1
        np.stack([uu, one, vv], axis=-1),    # face 2: y = +1
        np.stack([uu, -one, vv], axis=-1),   # face 3: y = -1
        np.stack([uu, vv, one], axis=-1),    # face 4: z = +1
        np.stack([uu, vv, -one], axis=-1),   # face 5: z = -1
    ]
    return np.stack(faces_xyz, axis=0)       # (6, n, n, 3)


def make_phi_theta(n):
    p = _cube_points(n)
    d = p / np.linalg.norm(p, axis=-1, keepdims=True)
    theta = np.arccos(np.clip(d[..., 2], -1.0, 1.0))   # (6, n, n)
    phi = np.arctan2(d[..., 1], d[..., 0])             # (6, n, n)
    return phi, theta


def make_angles(n):
    phi, theta = make_phi_theta(n)
    ang = np.stack([np.sin(theta) * np.cos(phi),
                    np.sin(theta) * np.sin(phi),
                    np.cos(theta)], axis=1)            # (6, 3, n, n)
    return ang.astype(np.float32)


def make_cube_faces(n):
    idx = np.arange(6 * n * n).reshape(6, n, n)
    a = idx[:, :-1, :-1]
    b = idx[:, 1:, :-1]
    c = idx[:, :-1, 1:]
    d = idx[:, 1:, 1:]
    t1 = np.stack([a, b, c], axis=-1)                  # (a, a+n, a+1)
    t2 = np.stack([b, d, c], axis=-1)                  # (a+n, a+n+1, a+1)
    tris = np.concatenate([t1, t2], axis=-1).reshape(-1, 3)
    return tris.astype(np.int32)                       # (12*(n-1)^2, 3)


def make_border_groups(n):
    # Vertices sharing the same cube position (edges/corners between the 6
    # faces) form a group; avg_border averages radii within each group.
    p = _cube_points(n).reshape(-1, 3)
    key = np.round(p, 6)
    _, inv, counts = np.unique(key, axis=0, return_inverse=True,
                               return_counts=True)
    return inv.reshape(-1).astype(np.int32), counts.astype(np.float32)


def _pad_lanes_np(x, vp):
    pad = vp - x.shape[-1]
    if pad:
        x = np.pad(x, ((0, 0), (0, pad)))
    return np.ascontiguousarray(x, dtype=np.float32)


# ----------------------------------------------------------------------------
# pltpu.roll rotation-convention probe (one tiny one-off kernel at init time)
# ----------------------------------------------------------------------------
def _probe_roll_is_numpy():
    """True if pltpu.roll follows np.roll convention (out[i] = x[i - shift])."""
    width, shift = 256, 17

    def probe_kernel(x_ref, o_ref):
        o_ref[...] = pltpu.roll(x_ref[...], shift=shift, axis=1)

    x_np = np.broadcast_to(np.arange(width, dtype=np.float32)[None, :],
                           (3, width)).copy()
    out = pl.pallas_call(
        probe_kernel,
        out_shape=jax.ShapeDtypeStruct((3, width), jnp.float32),
        grid=(1,),
        in_specs=[pl.BlockSpec((3, width), lambda i: (0, 0))],
        out_specs=pl.BlockSpec((3, width), lambda i: (0, 0)),
    )(jnp.asarray(x_np))
    out_np = np.asarray(jax.block_until_ready(out))
    if np.array_equal(out_np, np.roll(x_np, shift, axis=1)):
        return True
    if np.array_equal(out_np, np.roll(x_np, -shift, axis=1)):
        return False
    return True


# ----------------------------------------------------------------------------
# Fused Pallas kernel
# ----------------------------------------------------------------------------
def _build_fused_kernel(n, vp, roll_is_numpy):
    def shift_plus(x, k):
        # out[..., i] = x[..., (i + k) % vp]
        amt = (vp - k) % vp if roll_is_numpy else k % vp
        return pltpu.roll(x, shift=amt, axis=1)

    def shift_minus(x, k):
        # out[..., i] = x[..., (i - k) % vp]
        amt = k % vp if roll_is_numpy else (vp - k) % vp
        return pltpu.roll(x, shift=amt, axis=1)

    def kernel(r_ref, ang_ref, mask_ref, sign_ref, vert_ref, nrm_ref):
        # --- 1) vertices: sigmoid(avg_border(radii)) * angles ---------------
        vert = ang_ref[...] * jax.nn.sigmoid(r_ref[...])      # (3, vp)
        vert_ref[...] = vert                                   # lane-dense store

        # --- 2) face normals: corners at fixed lane offsets from anchor a ---
        #     t1 = (a, a+n, a+1),  t2 = (a+n, a+n+1, a+1)
        vb = shift_plus(vert, n)
        vc = shift_plus(vert, 1)
        vd = shift_plus(vert, n + 1)
        m = mask_ref[...]                                      # (1, vp) anchor-valid

        def comps(x):
            return x[0:1, :], x[1:2, :], x[2:3, :]

        def cross(p, q):
            px, py, pz = comps(p)
            qx, qy, qz = comps(q)
            return (py * qz - pz * qy,
                    pz * qx - px * qz,
                    px * qy - py * qx)

        ax, ay, az = cross(vb - vert, vc - vert)               # cross(b-a, c-a)
        bx, by, bz = cross(vd - vb, vc - vb)                   # cross(d-b, c-b)
        s1 = lax.rsqrt(ax * ax + ay * ay + az * az + _EPS) * m
        s2 = lax.rsqrt(bx * bx + by * by + bz * bz + _EPS) * m
        t1x, t1y, t1z = ax * s1, ay * s1, az * s1
        t2x, t2y, t2z = bx * s2, by * s2, bz * s2

        # --- 3) vertex normals: scatter-add == opposite-direction rolls -----
        #     acc[v] = t1[v] + (t1+t2)[v-1] + (t1+t2)[v-n] + t2[v-n-1]
        #     (wrap-around lanes always hit zeroed invalid anchors)
        def accum(c1, c2):
            c12 = c1 + c2
            return (c1 + shift_minus(c12, 1) + shift_minus(c12, n)
                    + shift_minus(c2, n + 1))

        accx, accy, accz = accum(t1x, t2x), accum(t1y, t2y), accum(t1z, t2z)
        inv = lax.rsqrt(accx * accx + accy * accy + accz * accz + _EPS) \
            * sign_ref[...]
        nx, ny, nz = accx * inv, accy * inv, accz * inv

        # assemble (3, vp) and write with a single lane-dense store
        rows = lax.broadcasted_iota(jnp.int32, (3, vp), 0)
        nx3 = jnp.broadcast_to(nx, (3, vp))
        ny3 = jnp.broadcast_to(ny, (3, vp))
        nz3 = jnp.broadcast_to(nz, (3, vp))
        nrm_ref[...] = jnp.where(rows == 0, nx3, jnp.where(rows == 1, ny3, nz3))

    return kernel


def _build_fused_call(n, vp, roll_is_numpy):
    kernel = _build_fused_kernel(n, vp, roll_is_numpy)
    # TODO(synk): for large n, tile the lane axis (with an (n+1)-lane halo or a
    # second reduction pass) instead of a single full-array block; v7x has only
    # 64 MiB VMEM (32 MiB scoped default).
    return pl.pallas_call(
        kernel,
        out_shape=(jax.ShapeDtypeStruct((3, vp), jnp.float32),
                   jax.ShapeDtypeStruct((3, vp), jnp.float32)),
        grid=(1,),
        in_specs=[pl.BlockSpec((1, vp), lambda i: (0, 0)),
                  pl.BlockSpec((3, vp), lambda i: (0, 0)),
                  pl.BlockSpec((1, vp), lambda i: (0, 0)),
                  pl.BlockSpec((1, vp), lambda i: (0, 0))],
        out_specs=(pl.BlockSpec((3, vp), lambda i: (0, 0)),
                   pl.BlockSpec((3, vp), lambda i: (0, 0))),
        compiler_params=pltpu.CompilerParams(
            dimension_semantics=("arbitrary",)),
    )


# ----------------------------------------------------------------------------
# Core module
# ----------------------------------------------------------------------------
class Core:
    def __init__(self, n, noise=0.025, seed=0):
        self.n = n
        self.v_count = 6 * n * n
        self.v_padded = ((self.v_count + 127) // 128) * 128

        # ---- buffers, hoisted out of forward() and stored in kernel layout ----
        angles = make_angles(n)                                   # (6, 3, n, n)
        self.angles = jnp.asarray(angles)
        ang_flat = np.transpose(angles, (1, 0, 2, 3)).reshape(3, self.v_count)
        self.angles_flat = jnp.asarray(_pad_lanes_np(ang_flat, self.v_padded))

        self.faces = jnp.asarray(make_cube_faces(n))              # (F, 3) int32

        inv, counts = make_border_groups(n)
        self.border_inv = jnp.asarray(inv)
        self.border_counts = jnp.asarray(counts)

        # anchor-validity mask: vertex k anchors a quad iff its in-face (i, j)
        # are both < n-1.
        k = np.arange(self.v_count)
        i = (k % (n * n)) // n
        j = k % n
        mask = ((i < n - 1) & (j < n - 1)).astype(np.float32).reshape(1, -1)
        self.anchor_mask = jnp.asarray(_pad_lanes_np(mask, self.v_padded))

        # per-vertex sign flip (stacked faces 0, 3, 4 are negated in PyTorch)
        face_sign = np.array([-1.0, 1.0, 1.0, -1.0, -1.0, 1.0], np.float32)
        sign = np.repeat(face_sign, n * n).reshape(1, -1)
        self.vertex_sign = jnp.asarray(_pad_lanes_np(sign, self.v_padded))

        # ---- parameter ----
        key = jax.random.PRNGKey(seed)
        self.radii = (jax.random.normal(key, (6, 1, n, n), dtype=jnp.float32)
                      * noise)

        # ---- fused Pallas kernel (built once) ----
        self._roll_is_numpy = _probe_roll_is_numpy()
        self._fused = _build_fused_call(n, self.v_padded, self._roll_is_numpy)
        self._forward_jit = jax.jit(self._forward_impl)

    # TODO(synk): avg_border's irregular coincident-vertex groups (cube edges /
    # corners) have no clean Pallas equivalent; the tiny segment_sum stays in XLA.
    def avg_border(self, radii):
        r = radii.reshape(-1)
        sums = jax.ops.segment_sum(r, self.border_inv,
                                   num_segments=self.border_counts.shape[0])
        return (sums / self.border_counts)[self.border_inv]       # (V,)

    def _forward_impl(self, radii):
        v, vp = self.v_count, self.v_padded
        r = self.avg_border(radii).reshape(1, v)
        if vp != v:
            r = jnp.pad(r, ((0, 0), (0, vp - v)))
        vert3, nrm3 = self._fused(r, self.angles_flat,
                                  self.anchor_mask, self.vertex_sign)
        if vp != v:
            vert3 = vert3[:, :v]
            nrm3 = nrm3[:, :v]
        return jnp.transpose(vert3), jnp.transpose(nrm3)          # (V, 3) each

    def forward(self):
        vert, normals = self._forward_jit(self.radii)
        return vert, self.faces, normals


# ----------------------------------------------------------------------------
# Pure-JAX reference of the same math (for the runtime correctness check)
# ----------------------------------------------------------------------------
def reference_forward(core):
    n, v = core.n, core.v_count
    r = core.radii.reshape(-1)
    sums = jax.ops.segment_sum(r, core.border_inv,
                               num_segments=core.border_counts.shape[0])
    avg = (sums / core.border_counts)[core.border_inv]
    stacked = jax.nn.sigmoid(avg).reshape(6, 1, n, n) * core.angles   # (6,3,n,n)
    vert = jnp.transpose(stacked, (0, 2, 3, 1)).reshape(v, 3)
    f = core.faces
    v0, v1, v2 = vert[f[:, 0]], vert[f[:, 1]], vert[f[:, 2]]
    c = jnp.cross(v1 - v0, v2 - v0)
    fn = c * lax.rsqrt(jnp.sum(c * c, axis=-1, keepdims=True) + _EPS)
    acc = jax.ops.segment_sum(jnp.repeat(fn, 3, axis=0), f.reshape(-1),
                              num_segments=v)
    nrm = acc * lax.rsqrt(jnp.sum(acc * acc, axis=-1, keepdims=True) + _EPS)
    face_sign = jnp.array([-1.0, 1.0, 1.0, -1.0, -1.0, 1.0], jnp.float32)
    return vert, nrm * jnp.repeat(face_sign, n * n)[:, None]


if __name__ == "__main__":
    n = 16
    core = Core(n, noise=0.025, seed=0)
    vert, faces, normals = core.forward()
    (vert, faces, normals) = jax.block_until_ready((vert, faces, normals))

    assert vert.shape == (6 * n * n, 3) and vert.dtype == jnp.float32
    assert normals.shape == (6 * n * n, 3) and normals.dtype == jnp.float32
    assert faces.shape == (12 * (n - 1) ** 2, 3)
    assert bool(jnp.all(jnp.isfinite(vert))) and bool(jnp.all(jnp.isfinite(normals)))

    # compare against the pure-JAX reference (same math, gather/scatter based)
    ref_vert, ref_nrm = jax.block_until_ready(reference_forward(core))
    np.testing.assert_allclose(np.asarray(vert), np.asarray(ref_vert),
                               rtol=1e-3, atol=1e-5)
    np.testing.assert_allclose(np.asarray(normals), np.asarray(ref_nrm),
                               rtol=1e-3, atol=1e-5)

    print("KERNEL_OK")
</pallas_src>

<mosaic_0001>
module attributes {stable_mosaic.version = 11 : i64} {
  func.func @probe_kernel(%arg0: i32, %arg1: memref<3x256xf32, #tpu.memory_space<vmem>>, %arg2: memref<3x256xf32, #tpu.memory_space<vmem>>) attributes {dimension_semantics = [#tpu.dimension_semantics<arbitrary>], iteration_bounds = array<i64: 1>, scalar_prefetch = 0 : i64, scratch_operands = 0 : i64, tpu.core_type = #tpu.core_type<tc>, window_params = [{pipeline_mode = #tpu.pipeline_mode<synchronous>, transform_indices = @transform_0, window_bounds = array<i64: 3, 256>}, {pipeline_mode = #tpu.pipeline_mode<synchronous>, transform_indices = @transform_1, window_bounds = array<i64: 3, 256>}]} {
    %c0 = arith.constant 0 : index
    %c0_0 = arith.constant 0 : index
    %0 = vector.load %arg1[%c0, %c0_0] : memref<3x256xf32, #tpu.memory_space<vmem>>, vector<3x256xf32>
    %c17_i32 = arith.constant 17 : i32
    %1 = tpu.dynamic_rotate %0 by %c17_i32 dim 1 : vector<3x256xf32>, i32 -> vector<3x256xf32>
    %c0_1 = arith.constant 0 : index
    %c0_2 = arith.constant 0 : index
    %2 = vector.load %arg2[%c0_1, %c0_2] : memref<3x256xf32, #tpu.memory_space<vmem>>, vector<3x256xf32>
    tpu.vector_store %arg2[%c0_1, %c0_2], %1 {strides = array<i32>} : memref<3x256xf32, #tpu.memory_space<vmem>>, vector<3x256xf32>,
    return
  }
  func.func @transform_0(%arg0: i32) -> (i32, i32) {
    %c0_i32 = arith.constant 0 : i32
    %c0_i32_0 = arith.constant 0 : i32
    %c0_i32_1 = arith.constant 0 : i32
    return %c0_i32, %c0_i32_0 : i32, i32
  }
  func.func @transform_1(%arg0: i32) -> (i32, i32) {
    %c0_i32 = arith.constant 0 : i32
    %c0_i32_0 = arith.constant 0 : i32
    %c0_i32_1 = arith.constant 0 : i32
    return %c0_i32, %c0_i32_0 : i32, i32
  }
}

</mosaic_0001>

<llo_original>
// kernel: tpu_custom_call.1
$region0: #{tpu_custom_call.1}
  #allocation0 [shape = 'u32[]', space=smem, size = 0x4, offset = 0x4, fixed_abs, tag = 'smem constant byte address 0x4 - core index']
  #allocation1 [shape = 'u32[72,128]{1,0:T(1,128)}', space=vmem, size = 0x9000, scoped, tag = 'internal scratch']
  %s0 = inlined_call_operand.hbm [shape: f32[3,256], index: 0, kind: input, shape index: {}]
  %s1 = inlined_call_operand.hbm [shape: f32[3,256], index: 1, kind: output, shape index: {}]
  %s2 = sld [smem:[#allocation0]]
  $region18: #{tpu_custom_call.1} parent=0
    _
  %s4 = ssub.s32 1, %s2
  %s5 = scalar_select 0, %s4, %s2
  $region1: #{tpu_custom_call.1} parent=0
    #allocation2 [shape = 'u8[4096]{0}', space=vmem, size = 0x1000, scoped, tag = 'input window, operand 0, single buffered']
    #allocation3 [shape = 's32[1]{0}', space=sflag, size = 0x4, scoped, tag = 'scoped memory for tpu_custom_call.1']
    #allocation4 [shape = 's32[1]{0}', space=sflag, size = 0x4, scoped, tag = 'scoped memory for tpu_custom_call.1']
    #allocation5 [shape = 'u8[4096]{0}', space=vmem, size = 0x1000, scoped, tag = 'output window, operand 0, single buffered']
    %6 = vsyncpa [#allocation3], 0
    %7 = vsyncpa [#allocation4], 0
    // Predicated region
    $region2: #{tpu_custom_call.1} parent=1 // pred_check
      _
    $region3: #{tpu_custom_call.1} parent=1 // pred_check_branch
      %9 = sbr.rel (0) target = $region5
    $region4: #{tpu_custom_call.1} parent=1 // pred_region
      %11 = vsyncadd [#allocation3], 0
      %s13 = sshll.u32 %s0, 4
      %s14 = int_to_ptr.hbm [resolvable:$true] %s13
      %s15 = sshll.u32 [#allocation2], 4
      %s16 = int_to_ptr.vmem [resolvable:$true] %s15
      %18 = dma.hbm_to_vmem [thread:$0]  %s14, 128, %s16, [#allocation3]
    $region5: #{tpu_custom_call.1} parent=1 // pred_fallthru
      _
    // Predicated region
    $region6: #{tpu_custom_call.1} parent=1 // pred_check
      _
    $region7: #{tpu_custom_call.1} parent=1 // pred_check_branch
      %20 = sbr.rel (0) target = $region9
    $region8: #{tpu_custom_call.1} parent=1 // pred_region
      %22 = dma.done [#allocation3], 128
    $region9: #{tpu_custom_call.1} parent=1 // pred_fallthru
      _
    %v23 = vld [vmem:[#allocation2] sm:$0x77]
    %25 = vst [vmem:[#allocation1] ss:$2 sm:$0xff] %v23
    %v26 = vld.sshfl [vmem:[#allocation1] sm:$0xff pattern:$0x75316420]
    %v27 = vld.sshfl [vmem:[#allocation1 + $0x8] sm:$0xff pattern:$0x75316420]
    %30 = vrot.lane.b32.xlu0 %v26, 17
    %v31 = vpop.permute.xlu0 %30
    %32 = vrot.lane.b32.xlu0 %v27, 17
    %v33 = vpop.permute.xlu0 %32
    %v34 = vlaneseq
    %v35 = vand.u32 %v34, 127
    %vm36 = vcmp.lt.s32.totalorder %v35, 17
    %v37 = vsel %vm36, %v31, %v33
    %v38 = vsel %vm36, %v33, %v31
    %v41 = vrot.slane %v37, 4
    %vm42 = vcmask 1043456
    %v43 = vsel %vm42, %v38, %v41
    %45 = vst [vmem:[#allocation5] sm:$0x77] %v43
    // Predicated region
    $region10: #{tpu_custom_call.1} parent=1 // pred_check
      _
    $region11: #{tpu_custom_call.1} parent=1 // pred_check_branch
      %47 = sbr.rel (0) target = $region13
    $region12: #{tpu_custom_call.1} parent=1 // pred_region
      %49 = vsyncadd [#allocation4], 0
      %s51 = sshll.u32 [#allocation5], 4
      %s52 = int_to_ptr.vmem [resolvable:$true] %s51
      %s53 = sshll.u32 %s1, 4
      %s54 = int_to_ptr.hbm [resolvable:$true] %s53
      %56 = dma.vmem_to_hbm [thread:$0]  %s52, 128, %s54, [#allocation4]
    $region13: #{tpu_custom_call.1} parent=1 // pred_fallthru
      _
    // Predicated region
    $region14: #{tpu_custom_call.1} parent=1 // pred_check
      _
    $region15: #{tpu_custom_call.1} parent=1 // pred_check_branch
      %58 = sbr.rel (0) target = $region17
    $region16: #{tpu_custom_call.1} parent=1 // pred_region
      %60 = dma.done [#allocation4], 128
    $region17: #{tpu_custom_call.1} parent=1 // pred_fallthru
      _
    %61 = vsyncpa [#allocation3], 1
    %62 = vsyncpa [#allocation4], 1

</llo_original>
